<compile_context>
chip_gen: v6e
topology: v6e:2x2x1
jax: 0.10.0
libtpu: 0.0.40
codegen_flags: <defaults>
</compile_context>

<pallas_src>
import jax
import jax.numpy as jnp
from jax.experimental import pallas as pl
from jax.experimental.pallas import tpu as pltpu


_LANE = 128
# Prefer a wide, lane-dense last dim; wider lanes amortize per-row overhead.
_LANE_CANDIDATES = (8192, 4096, 2048, 1024, 512, 256, _LANE)
# Above this size, guarantee >= 2 grid steps so both v7x TCs can stream.
_MIN_SPLIT_BYTES = 2 * 1024 * 1024


def _identity_kernel(x_ref, o_ref):
    # The entire "compute" of IdentityNormLayer: copy the current tile.
    o_ref[...] = x_ref[...]


def _vmem_budget():
    """(block_bytes, vmem_limit_bytes) sized for the local TPU generation."""
    try:
        cap = pltpu.get_tpu_info().vmem_capacity_bytes
    except Exception:
        cap = 64 * 1024 * 1024                  # conservative (v7x-sized) default
    if cap >= 96 * 1024 * 1024:                 # v5e / v6e: 128 MiB physical VMEM
        return 16 * 1024 * 1024, 80 * 1024 * 1024
    return 8 * 1024 * 1024, 40 * 1024 * 1024    # v7x: 64 MiB per TensorCore


def _choose_2d_view(total):
    """Lane-dense (rows, lanes) factorization; None if total % 128 != 0."""
    for lanes in _LANE_CANDIDATES:
        if total % lanes == 0:
            return total // lanes, lanes
    return None


def _row_tile(n_rows, lanes, itemsize, block_bytes):
    """Rows per block from a VMEM byte budget, sublane aligned."""
    sub = max(8, 32 // itemsize)                # 8 (f32), 16 (bf16), 32 (int8)
    rows = block_bytes // max(1, lanes * itemsize)
    rows = max((rows // sub) * sub, sub)
    if rows < n_rows:
        return rows
    # A single step would cover everything.  If the array is big enough to
    # matter, split into two steps so both v7x TensorCores stream.
    if n_rows >= 2 * sub and n_rows * lanes * itemsize >= _MIN_SPLIT_BYTES:
        half = ((n_rows // 2 + sub - 1) // sub) * sub
        return max(sub, min(half, n_rows))
    return n_rows


def identity_norm_layer(x: jax.Array) -> jax.Array:
    """IdentityNormLayer.forward(x) == x.

    A pure identity should not round-trip HBM, so this returns x untouched
    (zero cost).  Use identity_copy_pallas() when a freshly materialized
    on-device buffer is explicitly wanted.
    """
    return x


@jax.jit
def identity_copy_pallas(x: jax.Array) -> jax.Array:
    """Pallas streaming copy with identity semantics (y == x, fresh buffer)."""
    if x.size == 0 or x.ndim == 0:
        return x                                # nothing worth a kernel launch
    view = _choose_2d_view(x.size)
    if view is None:
        # Not a multiple of 128 lanes: the kernel would need masked
        # partial-lane stores; identity semantics let us simply return x.
        return x
    rows, lanes = view
    x2 = x.reshape(rows, lanes)

    block_bytes, vmem_limit = _vmem_budget()
    tile_r = _row_tile(rows, lanes, x2.dtype.itemsize, block_bytes)
    grid = (pl.cdiv(rows, tile_r),)

    out2 = pl.pallas_call(
        _identity_kernel,
        out_shape=jax.ShapeDtypeStruct((rows, lanes), x2.dtype),
        grid_spec=pltpu.PrefetchScalarGridSpec(
            num_scalar_prefetch=0,
            grid=grid,
            in_specs=[pl.BlockSpec((tile_r, lanes), lambda i: (i, 0))],
            out_specs=pl.BlockSpec((tile_r, lanes), lambda i: (i, 0)),
        ),
        compiler_params=pltpu.CompilerParams(
            dimension_semantics=("parallel",),   # shard rows across TCs (v7x)
            vmem_limit_bytes=vmem_limit,
        ),
    )(x2)

    return out2.reshape(x.shape)


if __name__ == "__main__":
    key = jax.random.PRNGKey(0)
    # Small NCHW input consistent with a backbone feature map.
    x = jax.random.normal(key, (2, 4, 16, 16), dtype=jnp.float32)

    # 1) Faithful forward: a true no-op, no data movement at all.
    y = jax.block_until_ready(identity_norm_layer(x))
    assert y.shape == x.shape and y.dtype == x.dtype
    assert bool(jnp.all(y == x))

    # 2) Explicit Pallas kernel (lane-dense streaming copy) on the same input.
    y_k = jax.block_until_ready(identity_copy_pallas(x))
    assert y_k.shape == x.shape and y_k.dtype == x.dtype
    assert bool(jnp.all(y_k == x))

    print("KERNEL_OK")
</pallas_src>

<mosaic_0001>
module attributes {stable_mosaic.version = 11 : i64} {
  func.func @_identity_kernel(%arg0: i32, %arg1: memref<1x2048xf32, #tpu.memory_space<vmem>>, %arg2: memref<1x2048xf32, #tpu.memory_space<vmem>>) attributes {dimension_semantics = [#tpu.dimension_semantics<parallel>], iteration_bounds = array<i64: 1>, scalar_prefetch = 0 : i64, scratch_operands = 0 : i64, tpu.core_type = #tpu.core_type<tc>, window_params = [{transform_indices = @transform_0, window_bounds = array<i64: 1, 2048>}, {transform_indices = @transform_1, window_bounds = array<i64: 1, 2048>}]} {
    %c0 = arith.constant 0 : index
    %c0_0 = arith.constant 0 : index
    %0 = vector.load %arg1[%c0, %c0_0] : memref<1x2048xf32, #tpu.memory_space<vmem>>, vector<1x2048xf32>
    %c0_1 = arith.constant 0 : index
    %c0_2 = arith.constant 0 : index
    %1 = vector.load %arg2[%c0_1, %c0_2] : memref<1x2048xf32, #tpu.memory_space<vmem>>, vector<1x2048xf32>
    tpu.vector_store %arg2[%c0_1, %c0_2], %0 {strides = array<i32>} : memref<1x2048xf32, #tpu.memory_space<vmem>>, vector<1x2048xf32>,
    return
  }
  func.func @transform_0(%arg0: i32) -> (i32, i32) {
    %c0_i32 = arith.constant 0 : i32
    %c0_i32_0 = arith.constant 0 : i32
    return %arg0, %c0_i32 : i32, i32
  }
  func.func @transform_1(%arg0: i32) -> (i32, i32) {
    %c0_i32 = arith.constant 0 : i32
    %c0_i32_0 = arith.constant 0 : i32
    return %arg0, %c0_i32 : i32, i32
  }
}

</mosaic_0001>

<llo_original>
// kernel: identity_copy_pallas.1
$region0: #{identity_copy_pallas.1}
  #allocation0 [shape = 'u32[]', space=smem, size = 0x4, offset = 0x4, fixed_abs, tag = 'smem constant byte address 0x4 - core index']
  #allocation1 [shape = 'u32[144,128]{1,0:T(1,128)}', space=vmem, size = 0x12000, scoped, tag = 'internal scratch']
  %s0 = inlined_call_operand.vmem [shape: f32[1,2048], index: 0, kind: input, shape index: {}]
  %s1 = inlined_call_operand.vmem [shape: f32[1,2048], index: 1, kind: output, shape index: {}]
  %s2 = sld [smem:[#allocation0]]
  $region14: #{identity_copy_pallas.1} parent=0
    _
  %s4 = ssub.s32 1, %s2
  %s5 = scalar_select 0, %s4, %s2
  // Predicated region
  $region2: #{identity_copy_pallas.1} parent=0 // pred_check
    _
  $region3: #{identity_copy_pallas.1} parent=0 // pred_check_branch
    %7 = sbr.rel (0) target = $region5
  $region4: #{identity_copy_pallas.1} parent=0 // pred_region
    _
  $region5: #{identity_copy_pallas.1} parent=0 // pred_fallthru
    _
  %v8 = vld [vmem:[%s0] sm:$0xff]
  %v9 = vld [vmem:[%s0 + $0x8] sm:$0xff]
  %10 = vst [vmem:[%s1] sm:$0xff] %v8
  %11 = vst [vmem:[%s1 + $0x8] sm:$0xff] %v9
  // Predicated region
  $region6: #{identity_copy_pallas.1} parent=0 // pred_check
    _
  $region7: #{identity_copy_pallas.1} parent=0 // pred_check_branch
    %13 = sbr.rel (0) target = $region9
  $region8: #{identity_copy_pallas.1} parent=0 // pred_region
    _
  $region9: #{identity_copy_pallas.1} parent=0 // pred_fallthru
    _
  // Predicated region
  $region10: #{identity_copy_pallas.1} parent=0 // pred_check
    _
  $region11: #{identity_copy_pallas.1} parent=0 // pred_check_branch
    %15 = sbr.rel (0) target = $region13
  $region12: #{identity_copy_pallas.1} parent=0 // pred_region
    _
  $region13: #{identity_copy_pallas.1} parent=0 // pred_fallthru
    _

</llo_original>
